<compile_context>
chip_gen: v6e
topology: v6e:2x2x1
jax: 0.10.0
libtpu: 0.0.40
codegen_flags: <defaults>
</compile_context>

<pallas_src>
import functools

import jax
import jax.numpy as jnp
from jax import lax
from jax.experimental import pallas as pl
from jax.experimental.pallas import tpu as pltpu


TARGET_BUF_BYTES = 4 * 1024 * 1024      # per grid-step input tile (x2 buffered)
VMEM_LIMIT_BYTES = 32 * 1024 * 1024


def _round_up(x, m):
    return ((x + m - 1) // m) * m


def _round_down(x, m):
    return (x // m) * m


def _apply_pow(x, p):
    """x ** p with cheap paths for p == 1 / 2 / integer (VPU only, no EUP)."""
    p = float(p)
    if p == 1.0:
        return x
    if p == 2.0:
        return x * x
    if p.is_integer():
        return lax.integer_pow(x, int(p))
    return x ** p                        # exp/log path; NaN for x<0 like torch


# ---------------------------------------------------------------------------
# Path A: all of HW fits in one block -> 1-D grid over rows, inner row chunks.
# ---------------------------------------------------------------------------
def _gap_single_block_kernel(x_ref, o_ref, *, p, inv_p, inv_hw, rc, n_rchunks,
                             unroll):
    def reduce_rows(rows):
        r = rows.astype(jnp.float32)
        r = _apply_pow(r, p)
        m = jnp.sum(r, axis=-1, keepdims=True) * inv_hw
        m = _apply_pow(m, inv_p)
        return m.astype(o_ref.dtype)

    if n_rchunks <= 1:
        o_ref[...] = reduce_rows(x_ref[...])
    else:
        def body(i, carry):
            s = pl.multiple_of(i * rc, rc)
            o_ref[pl.ds(s, rc), :] = reduce_rows(x_ref[pl.ds(s, rc), :])
            return carry
        lax.fori_loop(0, n_rchunks, body, 0, unroll=unroll)


# ---------------------------------------------------------------------------
# Path B: large HW -> 2-D grid, streaming reduction with VMEM accumulator.
# ---------------------------------------------------------------------------
def _gap_chunked_kernel(x_ref, o_ref, acc_ref, *, p, inv_p, inv_hw, hw, tk,
                        n_chunks, mask_tail, unroll):
    k = pl.program_id(1)

    @pl.when(k == 0)
    def _init():
        acc_ref[...] = jnp.zeros_like(acc_ref)

    tm = acc_ref.shape[0]
    if mask_tail:
        lane = lax.broadcasted_iota(jnp.int32, (1, 128), 1)
        base = k * tk

    def body(c, psum):
        start = pl.multiple_of(c * 128, 128)
        chunk = x_ref[:, pl.ds(start, 128)].astype(jnp.float32)
        chunk = _apply_pow(chunk, p)
        if mask_tail:
            # lanes past the true hw hold garbage (possibly NaN after pow);
            # jnp.where drops them after the pow so any p is safe.
            valid = hw - (base + start)
            chunk = jnp.where(lane < valid, chunk, 0.0)
        return psum + chunk

    psum = lax.fori_loop(0, n_chunks, body,
                         jnp.zeros((tm, 128), jnp.float32), unroll=unroll)
    acc_ref[...] += psum

    @pl.when(k == pl.num_programs(1) - 1)
    def _finalize():
        total = jnp.sum(acc_ref[...], axis=-1, keepdims=True)   # single XLU reduce
        mean = total * inv_hw
        mean = _apply_pow(mean, inv_p)
        o_ref[...] = mean.astype(o_ref.dtype)


# ---------------------------------------------------------------------------
# Wrapper
# ---------------------------------------------------------------------------
def global_avg_pool_2d(x, p=1):
    """Pallas equivalent of GlobalAvgPool2d.forward for NCHW input."""
    N, C, H, W = x.shape
    nc, hw = N * C, H * W
    p = float(p)
    inv_p = 1.0 / p                       # p == 0 raises, same as torch (1/self.p)
    x2 = x.reshape(nc, hw)

    itemsize = jnp.dtype(x.dtype).itemsize
    row_align = 8 if itemsize >= 4 else (16 if itemsize == 2 else 32)

    out_shape = jax.ShapeDtypeStruct((nc, 1), x.dtype)
    cost = pl.CostEstimate(
        flops=2 * nc * hw,
        transcendentals=0 if p == 1.0 else 2 * nc * hw,
        bytes_accessed=nc * hw * itemsize + nc * itemsize,
    )

    # rows per inner chunk for the single-block path: ~<= 1 MiB per chunk.
    rc = max(row_align,
             min(256, _round_down((1 << 20) // (hw * itemsize), row_align)))

    if hw * itemsize * 128 <= TARGET_BUF_BYTES:
        # ------------------- Path A: single HW block -----------------------
        rows_budget = max(rc, min(8192, TARGET_BUF_BYTES // (hw * itemsize)))
        rows_budget = max(rc, _round_down(rows_budget, rc))
        if nc > rows_budget:
            tm = rows_budget                        # multiple of rc (and of 8)
        else:
            tm = nc                                 # full extent (always legal)
            # Give the parallel axis >= 2 tiles for v7x megacore when there is
            # enough data for both TensorCores to stream something meaningful.
            if nc * hw * itemsize >= (1 << 20) and nc >= 4 * row_align:
                half_align = rc if (nc + 1) // 2 >= rc else row_align
                half = _round_up((nc + 1) // 2, half_align)
                if half < nc:
                    tm = half
        n_rchunks = tm // rc if (tm % rc == 0 and tm > rc) else 1
        unroll = min(4, n_rchunks) if n_rchunks > 1 else 1

        kernel = functools.partial(
            _gap_single_block_kernel, p=p, inv_p=inv_p, inv_hw=1.0 / hw,
            rc=rc, n_rchunks=n_rchunks, unroll=unroll)

        out2 = pl.pallas_call(
            kernel,
            out_shape=out_shape,
            grid_spec=pltpu.PrefetchScalarGridSpec(
                num_scalar_prefetch=0,
                grid=(pl.cdiv(nc, tm),),
                in_specs=[pl.BlockSpec((tm, hw), lambda i: (i, 0))],
                out_specs=pl.BlockSpec((tm, 1), lambda i: (i, 0)),
            ),
            compiler_params=pltpu.CompilerParams(
                dimension_semantics=("parallel",),
                vmem_limit_bytes=VMEM_LIMIT_BYTES),
            cost_estimate=cost,
        )(x2)
    else:
        # ------------------- Path B: streaming over HW ---------------------
        if nc > 128:
            tm = 128                               # register-resident partial
        else:
            tm = nc                                # full extent (always legal)
            if nc >= 4 * row_align:                # v7x: try for 2 row tiles
                half = _round_up((nc + 1) // 2, row_align)
                if half < nc:
                    tm = half
        tk_budget = max(128, _round_down(TARGET_BUF_BYTES // (tm * itemsize), 128))
        tk = min(tk_budget, _round_down(hw, 128))  # multiple of 128, <= hw
        n_chunks = tk // 128
        mask_tail = (hw % tk) != 0

        kernel = functools.partial(
            _gap_chunked_kernel, p=p, inv_p=inv_p, inv_hw=1.0 / hw,
            hw=hw, tk=tk, n_chunks=n_chunks, mask_tail=mask_tail, unroll=4)

        out2 = pl.pallas_call(
            kernel,
            out_shape=out_shape,
            grid_spec=pltpu.PrefetchScalarGridSpec(
                num_scalar_prefetch=0,
                grid=(pl.cdiv(nc, tm), pl.cdiv(hw, tk)),
                in_specs=[pl.BlockSpec((tm, tk), lambda i, k: (i, k))],
                out_specs=pl.BlockSpec((tm, 1), lambda i, k: (i, 0)),
                scratch_shapes=[pltpu.VMEM((tm, 128), jnp.float32)],
            ),
            compiler_params=pltpu.CompilerParams(
                dimension_semantics=("parallel", "arbitrary"),
                vmem_limit_bytes=VMEM_LIMIT_BYTES),
            cost_estimate=cost,
        )(x2)

    return out2.reshape(N, C, 1, 1)


if __name__ == "__main__":
    key = jax.random.PRNGKey(0)

    # 1) module default (p=1): plain global average pool, 16x16 spatial.
    x = jax.random.normal(key, (2, 4, 16, 16), dtype=jnp.float32)
    out = jax.block_until_ready(global_avg_pool_2d(x, p=1))
    ref = jnp.mean(x, axis=(2, 3), keepdims=True)
    assert out.shape == (2, 4, 1, 1), out.shape
    assert jnp.allclose(out, ref, atol=1e-5, rtol=1e-5), (
        float(jnp.max(jnp.abs(out - ref))))

    # 2) generalized-mean path (p=2) on a non-128-multiple spatial size (7x7).
    x2 = jax.random.normal(jax.random.PRNGKey(1), (2, 3, 7, 7), dtype=jnp.float32)
    out2 = jax.block_until_ready(global_avg_pool_2d(x2, p=2))
    ref2 = jnp.sqrt(jnp.mean(x2 * x2, axis=(2, 3), keepdims=True))
    assert out2.shape == (2, 3, 1, 1), out2.shape
    assert jnp.allclose(out2, ref2, atol=1e-5, rtol=1e-5), (
        float(jnp.max(jnp.abs(out2 - ref2))))

    # 3) large-HW streaming path with a ragged (masked) HW tail.
    x3 = jax.random.normal(jax.random.PRNGKey(2), (2, 4, 97, 97), dtype=jnp.float32)
    out3 = jax.block_until_ready(global_avg_pool_2d(x3, p=1))
    ref3 = jnp.mean(x3, axis=(2, 3), keepdims=True)
    assert out3.shape == (2, 4, 1, 1), out3.shape
    assert jnp.allclose(out3, ref3, atol=1e-5, rtol=1e-5), (
        float(jnp.max(jnp.abs(out3 - ref3))))

    print("KERNEL_OK")
</pallas_src>

<mosaic_0001>
module attributes {stable_mosaic.version = 11 : i64} {
  func.func @_gap_single_block_kernel(%arg0: i32, %arg1: memref<8x256xf32, #tpu.memory_space<vmem>>, %arg2: memref<8x1xf32, #tpu.memory_space<vmem>>) attributes {dimension_semantics = [#tpu.dimension_semantics<parallel>], iteration_bounds = array<i64: 1>, scalar_prefetch = 0 : i64, scratch_operands = 0 : i64, tpu.core_type = #tpu.core_type<tc>, window_params = [{transform_indices = @transform_0, window_bounds = array<i64: 8, 256>}, {transform_indices = @transform_1, window_bounds = array<i64: 8, 1>}]} {
    %c0 = arith.constant 0 : index
    %c0_0 = arith.constant 0 : index
    %0 = vector.load %arg1[%c0, %c0_0] : memref<8x256xf32, #tpu.memory_space<vmem>>, vector<8x256xf32>
    %cst = arith.constant dense<0.000000e+00> : vector<8xf32>
    %1 = vector.multi_reduction <add>, %0, %cst [1] : vector<8x256xf32> to vector<8xf32>
    %2 = vector.shape_cast %1 : vector<8xf32> to vector<8x1xf32>
    %cst_1 = arith.constant 3.906250e-03 : f32
    %3 = vector.broadcast %cst_1 : f32 to vector<8x1xf32>
    %4 = arith.mulf %2, %3 : vector<8x1xf32>
    %c0_2 = arith.constant 0 : index
    %c0_3 = arith.constant 0 : index
    %5 = vector.load %arg2[%c0_2, %c0_3] : memref<8x1xf32, #tpu.memory_space<vmem>>, vector<8x1xf32>
    tpu.vector_store %arg2[%c0_2, %c0_3], %4 {strides = array<i32>} : memref<8x1xf32, #tpu.memory_space<vmem>>, vector<8x1xf32>,
    return
  }
  func.func @transform_0(%arg0: i32) -> (i32, i32) {
    %c0_i32 = arith.constant 0 : i32
    %c0_i32_0 = arith.constant 0 : i32
    return %arg0, %c0_i32 : i32, i32
  }
  func.func @transform_1(%arg0: i32) -> (i32, i32) {
    %c0_i32 = arith.constant 0 : i32
    %c0_i32_0 = arith.constant 0 : i32
    return %arg0, %c0_i32 : i32, i32
  }
}

</mosaic_0001>

<llo_original>
// kernel: tpu_custom_call.1
$region0: #{tpu_custom_call.1}
  #allocation0 [shape = 'u32[]', space=smem, size = 0x4, offset = 0x4, fixed_abs, tag = 'smem constant byte address 0x4 - core index']
  #allocation1 [shape = 'u32[144,128]{1,0:T(1,128)}', space=vmem, size = 0x12000, scoped, tag = 'internal scratch']
  %s0 = inlined_call_operand.hbm [shape: f32[8,256], index: 0, kind: input, shape index: {}]
  %s1 = inlined_call_operand.vmem [shape: f32[8,1], index: 1, kind: output, shape index: {}]
  %s2 = sld [smem:[#allocation0]]
  $region18: #{tpu_custom_call.1} parent=0
    _
  %s4 = ssub.s32 1, %s2
  %s5 = scalar_select 0, %s4, %s2
  $region1: #{tpu_custom_call.1} parent=0
    #allocation2 [shape = 'u8[8192]{0}', space=vmem, size = 0x2000, scoped, tag = 'input window, operand 0, single buffered']
    #allocation3 [shape = 's32[1]{0}', space=sflag, size = 0x4, scoped, tag = 'scoped memory for tpu_custom_call.1']
    %6 = vsyncpa [#allocation3], 0
    // Predicated region
    $region2: #{tpu_custom_call.1} parent=1 // pred_check
      _
    $region3: #{tpu_custom_call.1} parent=1 // pred_check_branch
      %8 = sbr.rel (0) target = $region5
    $region4: #{tpu_custom_call.1} parent=1 // pred_region
      %s10 = ssub.s32 256, 256
      %11 = vsyncadd [#allocation3], %s10
      %s13 = sshll.u32 [#allocation2], 4
      %s14 = int_to_ptr.vmem [resolvable:$true] %s13
      %16 = dma.hbm_to_vmem [thread:$0]  %s0, 256, %s14, [#allocation3]
    $region5: #{tpu_custom_call.1} parent=1 // pred_fallthru
      _
    // Predicated region
    $region6: #{tpu_custom_call.1} parent=1 // pred_check
      _
    $region7: #{tpu_custom_call.1} parent=1 // pred_check_branch
      %18 = sbr.rel (0) target = $region9
    $region8: #{tpu_custom_call.1} parent=1 // pred_region
      %19 = dma.done [#allocation3], 256
    $region9: #{tpu_custom_call.1} parent=1 // pred_fallthru
      _
    %v20 = vld [vmem:[#allocation2] sm:$0xff]
    %v21 = vld [vmem:[#allocation2 + $0x8] sm:$0xff]
    %v22 = vadd.f32 %v20, %v21
    %23 = vadd.xlane.f32.xlu0 %v22
    %v24 = vpop.xlane.xlu0 %23
    %v25 = vmul.f32 %v24, 0.00390625
    %vm26 = vcmask 7168
    %27 = vst.msk [vmem:[%s1] sm:$0xff] %vm26, %v25
    // Predicated region
    $region10: #{tpu_custom_call.1} parent=1 // pred_check
      _
    $region11: #{tpu_custom_call.1} parent=1 // pred_check_branch
      %29 = sbr.rel (0) target = $region13
    $region12: #{tpu_custom_call.1} parent=1 // pred_region
      _
    $region13: #{tpu_custom_call.1} parent=1 // pred_fallthru
      _
    // Predicated region
    $region14: #{tpu_custom_call.1} parent=1 // pred_check
      _
    $region15: #{tpu_custom_call.1} parent=1 // pred_check_branch
      %31 = sbr.rel (0) target = $region17
    $region16: #{tpu_custom_call.1} parent=1 // pred_region
      _
    $region17: #{tpu_custom_call.1} parent=1 // pred_fallthru
      _
    %32 = vsyncpa [#allocation3], 1

</llo_original>
